<compile_context>
chip_gen: v6e
topology: v6e:2x2x1
jax: 0.10.0
libtpu: 0.0.40
codegen_flags: <defaults>
</compile_context>

<pallas_src>
import functools

import jax
import jax.numpy as jnp
from jax.experimental import pallas as pl
from jax.experimental.pallas import tpu as pltpu


_NEG_INIT = float(jnp.finfo(jnp.float32).min)


def _label_smoothing_kernel(
    x_ref, t_ref, o_ref,
    m_sc, l_sc, gath_sc, xsum_sc,
    *, confidence, smoothing, true_c, mask_c,
):
    ci = pl.program_id(1)            # class-tile index (innermost, "arbitrary")
    nc = pl.num_programs(1)
    tc = x_ref.shape[-1]
    last_c = ci == nc - 1

    # ---- per-batch-tile init of the streaming per-row state ----
    @pl.when(ci == 0)
    def _():
        m_sc[...] = jnp.full_like(m_sc, _NEG_INIT)
        l_sc[...] = jnp.zeros_like(l_sc)
        gath_sc[...] = jnp.zeros_like(gath_sc)
        xsum_sc[...] = jnp.zeros_like(xsum_sc)

    x = x_ref[...].astype(jnp.float32)          # (tb, tc); upcast in-kernel (free under DMA)
    t = t_ref[...]                              # (tb, 1) int32
    col = jax.lax.broadcasted_iota(jnp.int32, x.shape, 1) + ci * tc   # global class index
    onehot = col == t                           # never true for col >= true_c (t < true_c)

    def accumulate(x_m, x_s):
        # online log-sum-exp update
        m_old = m_sc[...]
        m_new = jnp.maximum(m_old, jnp.max(x_m, axis=-1, keepdims=True))
        alpha = jnp.exp(m_old - m_new)
        p = jnp.exp(x_m - m_new)
        l_sc[...] = alpha * l_sc[...] + jnp.sum(p, axis=-1, keepdims=True)
        m_sc[...] = m_new
        # logit at the target class (one-hot select; no dynamic gather on TPU)
        gath_sc[...] += jnp.sum(jnp.where(onehot, x, 0.0), axis=-1, keepdims=True)
        # running sum of logits over true classes (for the smoothing term)
        xsum_sc[...] += jnp.sum(x_s, axis=-1, keepdims=True)
        # TODO(synk): offload the two row-sums to the idle MXU (dot against a ones
        # (tc,1) vector) once multi-pass f32 matmul precision is confirmed on the
        # target generation -- a VALU-slot win on v7x / bf16-v6e.

    if mask_c:
        # Only the LAST class tile can contain out-of-bounds columns; gate the
        # masked (~3 extra VALU ops/element) path to it. The ragged trailing
        # block always holds >= 1 valid column, so m_new stays finite for
        # every valid row (NaN-free online LSE).
        @pl.when(last_c)
        def _():
            valid_c = col < true_c
            accumulate(jnp.where(valid_c, x, _NEG_INIT),   # excluded from max / exp
                       jnp.where(valid_c, x, 0.0))         # excluded from sum(x)

        @pl.when(jnp.logical_not(last_c))
        def _():
            accumulate(x, x)
    else:
        accumulate(x, x)

    # ---- per-row loss for this batch tile, written once at the last class tile ----
    # (Ragged trailing output rows are clipped on writeback; garbage batch rows
    #  only ever flow through selects, never into valid rows.)
    @pl.when(last_c)
    def _():
        lse = m_sc[...] + jnp.log(l_sc[...])               # (tb, 1)
        # confidence*nll + smoothing*smooth == lse - conf*x[t] - (smooth/C)*sum(x)
        o_ref[...] = lse - confidence * gath_sc[...] - (smoothing / true_c) * xsum_sc[...]


def _round_up(v, m):
    return (v + m - 1) // m * m


def _default_vmem_limit_bytes():
    """Generation-aware scoped-VMEM budget (per core)."""
    try:
        kind = jax.devices()[0].device_kind.lower()
    except Exception:
        kind = ""
    if "v2" in kind or "v3" in kind:
        return 10 * 1024 * 1024
    if any(g in kind for g in ("v4", "v5", "v6")):
        return 96 * 1024 * 1024          # 128 MiB physical VMEM
    return 48 * 1024 * 1024              # v7x: 64 MiB per core; also a safe fallback


def label_smoothing_loss(x, target, smoothing=0.1, *,
                         block_b=512, block_c=4096, vmem_limit_bytes=None):
    """x: [B, C] float logits (f32/bf16), target: [B] int class ids -> scalar f32 loss."""
    confidence = 1.0 - smoothing
    b, c = x.shape
    itemsize = jnp.dtype(x.dtype).itemsize
    if vmem_limit_bytes is None:
        vmem_limit_bytes = _default_vmem_limit_bytes()

    # ---- class-axis tiling (streaming LSE for vocab-scale C); C is NOT padded ----
    if c <= block_c:
        tc = c                           # single class tile: full dim, no lane constraint
    else:
        tc = _round_up(block_c, 128)     # lane-aligned tile; trailing block is ragged
    nc = pl.cdiv(c, tc)
    mask_c = (c % tc) != 0

    # ---- batch-axis tiling, clamped so everything fits 0.8 * the VMEM budget ----
    # Per batch-row VMEM: 2 double-buffered x tiles + 2 target + 2 output buffers
    # + 4 scratch vectors; every (tb,1) buffer pads to 128 lanes (512 B/row each).
    per_row_bytes = 2 * tc * itemsize + 8 * 128 * 4
    budget = int(0.8 * vmem_limit_bytes)
    rows_fit = max(8, (budget // per_row_bytes) // 8 * 8)
    tb = max(8, min(block_b, rows_fit))
    if b <= tb:
        tb = b                           # single batch tile: full dim allowed
    nb = pl.cdiv(b, tb)                  # trailing batch block may be ragged

    target_2d = target.astype(jnp.int32).reshape(b, 1)

    kernel = functools.partial(
        _label_smoothing_kernel,
        confidence=confidence, smoothing=smoothing, true_c=c, mask_c=mask_c,
    )

    per_row_loss = pl.pallas_call(
        kernel,
        out_shape=jax.ShapeDtypeStruct((b, 1), jnp.float32),
        grid_spec=pltpu.PrefetchScalarGridSpec(
            num_scalar_prefetch=0,
            grid=(nb, nc),
            in_specs=[
                pl.BlockSpec((tb, tc), lambda i, j: (i, j)),
                # target as a (tb,1) VMEM block: the one-hot compare needs a per-row
                # vector; lane padding is ~tb*512 B per buffer, negligible vs logits.
                pl.BlockSpec((tb, 1), lambda i, j: (i, 0)),
            ],
            out_specs=pl.BlockSpec((tb, 1), lambda i, j: (i, 0)),
            scratch_shapes=[
                pltpu.VMEM((tb, 1), jnp.float32),   # running max (m)
                pltpu.VMEM((tb, 1), jnp.float32),   # running sum(exp) (l)
                pltpu.VMEM((tb, 1), jnp.float32),   # gathered logit at target
                pltpu.VMEM((tb, 1), jnp.float32),   # running sum of logits
            ],
        ),
        compiler_params=pltpu.CompilerParams(
            # Batch tiles are independent (per-row output, per-tile scratch reset)
            # -> "parallel" so v7x's two TensorCores split them. The class axis
            # carries the streaming LSE state -> "arbitrary".
            dimension_semantics=("parallel", "arbitrary"),
            vmem_limit_bytes=vmem_limit_bytes,
        ),
    )(x, target_2d)

    return jnp.mean(per_row_loss)


def _reference(x, target, smoothing):
    confidence = 1.0 - smoothing
    logprobs = jax.nn.log_softmax(x.astype(jnp.float32), axis=-1)
    nll = -jnp.take_along_axis(logprobs, target[:, None].astype(jnp.int32), axis=-1)[:, 0]
    smooth = -jnp.mean(logprobs, axis=-1)
    return jnp.mean(confidence * nll + smoothing * smooth)


if __name__ == "__main__":
    key = jax.random.PRNGKey(0)
    k1, k2, k3, k4 = jax.random.split(key, 4)

    # --- test 1: small f32, single tile (the module's typical small case) ---
    B, C = 8, 32
    x = jax.random.normal(k1, (B, C), dtype=jnp.float32)
    t = jax.random.randint(k2, (B,), 0, C, dtype=jnp.int32)
    loss = jax.block_until_ready(label_smoothing_loss(x, t, smoothing=0.1))
    ref = _reference(x, t, 0.1)
    assert jnp.allclose(loss, ref, atol=1e-5, rtol=1e-5), (loss, ref)

    # --- test 2: bf16, forces ragged batch + class tiles (no wrapper-side padding) ---
    B2, C2 = 10, 300
    x2 = jax.random.normal(k3, (B2, C2), dtype=jnp.float32).astype(jnp.bfloat16)
    t2 = jax.random.randint(k4, (B2,), 0, C2, dtype=jnp.int32)
    loss2 = jax.block_until_ready(
        label_smoothing_loss(x2, t2, smoothing=0.2, block_b=8, block_c=128))
    ref2 = _reference(x2, t2, 0.2)
    assert jnp.allclose(loss2, ref2, atol=1e-3, rtol=1e-3), (loss2, ref2)

    print("KERNEL_OK")
</pallas_src>

<mosaic_0001>
module attributes {stable_mosaic.version = 11 : i64} {
  func.func @_label_smoothing_kernel(%arg0: i32, %arg1: i32, %arg2: memref<8x32xf32, #tpu.memory_space<vmem>>, %arg3: memref<8x1xi32, #tpu.memory_space<vmem>>, %arg4: memref<8x1xf32, #tpu.memory_space<vmem>>, %arg5: memref<8x1xf32, #tpu.memory_space<vmem>>, %arg6: memref<8x1xf32, #tpu.memory_space<vmem>>, %arg7: memref<8x1xf32, #tpu.memory_space<vmem>>, %arg8: memref<8x1xf32, #tpu.memory_space<vmem>>) attributes {dimension_semantics = [#tpu.dimension_semantics<parallel>, #tpu.dimension_semantics<arbitrary>], iteration_bounds = array<i64: 1, 1>, scalar_prefetch = 0 : i64, scratch_operands = 4 : i64, tpu.core_type = #tpu.core_type<tc>, window_params = [{transform_indices = @transform_0, window_bounds = array<i64: 8, 32>}, {transform_indices = @transform_1, window_bounds = array<i64: 8, 1>}, {transform_indices = @transform_2, window_bounds = array<i64: 8, 1>}]} {
    %c0_i32 = arith.constant 0 : i32
    %0 = arith.cmpi eq, %arg1, %c0_i32 : i32
    %c0_i32_0 = arith.constant 0 : i32
    %1 = arith.cmpi eq, %arg1, %c0_i32_0 : i32
    %2 = arith.extui %1 : i1 to i32
    %c0_i32_1 = arith.constant 0 : i32
    %3 = arith.cmpi ne, %2, %c0_i32_1 : i32
    scf.if %3 {
      %cst_26 = arith.constant -3.40282347E+38 : f32
      %42 = vector.broadcast %cst_26 : f32 to vector<8x1xf32>
      %c0_27 = arith.constant 0 : index
      %c0_28 = arith.constant 0 : index
      %43 = vector.load %arg5[%c0_27, %c0_28] : memref<8x1xf32, #tpu.memory_space<vmem>>, vector<8x1xf32>
      tpu.vector_store %arg5[%c0_27, %c0_28], %42 {strides = array<i32>} : memref<8x1xf32, #tpu.memory_space<vmem>>, vector<8x1xf32>,
      %cst_29 = arith.constant 0.000000e+00 : f32
      %44 = vector.broadcast %cst_29 : f32 to vector<8x1xf32>
      %c0_30 = arith.constant 0 : index
      %c0_31 = arith.constant 0 : index
      %45 = vector.load %arg6[%c0_30, %c0_31] : memref<8x1xf32, #tpu.memory_space<vmem>>, vector<8x1xf32>
      tpu.vector_store %arg6[%c0_30, %c0_31], %44 {strides = array<i32>} : memref<8x1xf32, #tpu.memory_space<vmem>>, vector<8x1xf32>,
      %cst_32 = arith.constant 0.000000e+00 : f32
      %46 = vector.broadcast %cst_32 : f32 to vector<8x1xf32>
      %c0_33 = arith.constant 0 : index
      %c0_34 = arith.constant 0 : index
      %47 = vector.load %arg7[%c0_33, %c0_34] : memref<8x1xf32, #tpu.memory_space<vmem>>, vector<8x1xf32>
      tpu.vector_store %arg7[%c0_33, %c0_34], %46 {strides = array<i32>} : memref<8x1xf32, #tpu.memory_space<vmem>>, vector<8x1xf32>,
      %cst_35 = arith.constant 0.000000e+00 : f32
      %48 = vector.broadcast %cst_35 : f32 to vector<8x1xf32>
      %c0_36 = arith.constant 0 : index
      %c0_37 = arith.constant 0 : index
      %49 = vector.load %arg8[%c0_36, %c0_37] : memref<8x1xf32, #tpu.memory_space<vmem>>, vector<8x1xf32>
      tpu.vector_store %arg8[%c0_36, %c0_37], %48 {strides = array<i32>} : memref<8x1xf32, #tpu.memory_space<vmem>>, vector<8x1xf32>,
    } else {
    }
    %c0 = arith.constant 0 : index
    %c0_2 = arith.constant 0 : index
    %4 = vector.load %arg2[%c0, %c0_2] : memref<8x32xf32, #tpu.memory_space<vmem>>, vector<8x32xf32>
    %c0_3 = arith.constant 0 : index
    %c0_4 = arith.constant 0 : index
    %5 = vector.load %arg3[%c0_3, %c0_4] : memref<8x1xi32, #tpu.memory_space<vmem>>, vector<8x1xi32>
    %6 = tpu.iota {dimensions = array<i32: 1>} : vector<8x32xi32>
    %c32_i32 = arith.constant 32 : i32
    %7 = arith.muli %arg1, %c32_i32 : i32
    %8 = vector.broadcast %7 : i32 to vector<8x32xi32>
    %9 = arith.addi %6, %8 : vector<8x32xi32>
    %10 = vector.broadcast %5 : vector<8x1xi32> to vector<8x32xi32>
    %11 = arith.cmpi eq, %9, %10 : vector<8x32xi32>
    %c0_5 = arith.constant 0 : index
    %c0_6 = arith.constant 0 : index
    %12 = vector.load %arg5[%c0_5, %c0_6] : memref<8x1xf32, #tpu.memory_space<vmem>>, vector<8x1xf32>
    %cst = arith.constant dense<0xFF800000> : vector<8xf32>
    %13 = vector.multi_reduction <maximumf>, %4, %cst [1] : vector<8x32xf32> to vector<8xf32>
    %14 = vector.shape_cast %13 : vector<8xf32> to vector<8x1xf32>
    %15 = arith.maximumf %12, %14 : vector<8x1xf32>
    %16 = arith.subf %12, %15 : vector<8x1xf32>
    %17 = math.exp %16 : vector<8x1xf32>
    %18 = vector.broadcast %15 : vector<8x1xf32> to vector<8x32xf32>
    %19 = arith.subf %4, %18 : vector<8x32xf32>
    %20 = math.exp %19 : vector<8x32xf32>
    %c0_7 = arith.constant 0 : index
    %c0_8 = arith.constant 0 : index
    %21 = vector.load %arg6[%c0_7, %c0_8] : memref<8x1xf32, #tpu.memory_space<vmem>>, vector<8x1xf32>
    %22 = arith.mulf %17, %21 : vector<8x1xf32>
    %cst_9 = arith.constant dense<0.000000e+00> : vector<8xf32>
    %23 = vector.multi_reduction <add>, %20, %cst_9 [1] : vector<8x32xf32> to vector<8xf32>
    %24 = vector.shape_cast %23 : vector<8xf32> to vector<8x1xf32>
    %25 = arith.addf %22, %24 : vector<8x1xf32>
    %c0_10 = arith.constant 0 : index
    %c0_11 = arith.constant 0 : index
    %26 = vector.load %arg6[%c0_10, %c0_11] : memref<8x1xf32, #tpu.memory_space<vmem>>, vector<8x1xf32>
    tpu.vector_store %arg6[%c0_10, %c0_11], %25 {strides = array<i32>} : memref<8x1xf32, #tpu.memory_space<vmem>>, vector<8x1xf32>,
    %c0_12 = arith.constant 0 : index
    %c0_13 = arith.constant 0 : index
    %27 = vector.load %arg5[%c0_12, %c0_13] : memref<8x1xf32, #tpu.memory_space<vmem>>, vector<8x1xf32>
    tpu.vector_store %arg5[%c0_12, %c0_13], %15 {strides = array<i32>} : memref<8x1xf32, #tpu.memory_space<vmem>>, vector<8x1xf32>,
    %c0_14 = arith.constant 0 : index
    %c0_15 = arith.constant 0 : index
    %28 = vector.load %arg7[%c0_14, %c0_15] : memref<8x1xf32, #tpu.memory_space<vmem>>, vector<8x1xf32>
    %cst_16 = arith.constant 0.000000e+00 : f32
    %29 = vector.broadcast %cst_16 : f32 to vector<8x32xf32>
    %30 = arith.select %11, %4, %29 : vector<8x32xi1>, vector<8x32xf32>
    %cst_17 = arith.constant dense<0.000000e+00> : vector<8xf32>
    %31 = vector.multi_reduction <add>, %30, %cst_17 [1] : vector<8x32xf32> to vector<8xf32>
    %32 = vector.shape_cast %31 : vector<8xf32> to vector<8x1xf32>
    %33 = arith.addf %28, %32 : vector<8x1xf32>
    %c0_18 = arith.constant 0 : index
    %c0_19 = arith.constant 0 : index
    %34 = vector.load %arg7[%c0_18, %c0_19] : memref<8x1xf32, #tpu.memory_space<vmem>>, vector<8x1xf32>
    tpu.vector_store %arg7[%c0_18, %c0_19], %33 {strides = array<i32>} : memref<8x1xf32, #tpu.memory_space<vmem>>, vector<8x1xf32>,
    %c0_20 = arith.constant 0 : index
    %c0_21 = arith.constant 0 : index
    %35 = vector.load %arg8[%c0_20, %c0_21] : memref<8x1xf32, #tpu.memory_space<vmem>>, vector<8x1xf32>
    %cst_22 = arith.constant dense<0.000000e+00> : vector<8xf32>
    %36 = vector.multi_reduction <add>, %4, %cst_22 [1] : vector<8x32xf32> to vector<8xf32>
    %37 = vector.shape_cast %36 : vector<8xf32> to vector<8x1xf32>
    %38 = arith.addf %35, %37 : vector<8x1xf32>
    %c0_23 = arith.constant 0 : index
    %c0_24 = arith.constant 0 : index
    %39 = vector.load %arg8[%c0_23, %c0_24] : memref<8x1xf32, #tpu.memory_space<vmem>>, vector<8x1xf32>
    tpu.vector_store %arg8[%c0_23, %c0_24], %38 {strides = array<i32>} : memref<8x1xf32, #tpu.memory_space<vmem>>, vector<8x1xf32>,
    %40 = arith.extui %0 : i1 to i32
    %c0_i32_25 = arith.constant 0 : i32
    %41 = arith.cmpi ne, %40, %c0_i32_25 : i32
    scf.if %41 {
      %c0_26 = arith.constant 0 : index
      %c0_27 = arith.constant 0 : index
      %42 = vector.load %arg5[%c0_26, %c0_27] : memref<8x1xf32, #tpu.memory_space<vmem>>, vector<8x1xf32>
      %c0_28 = arith.constant 0 : index
      %c0_29 = arith.constant 0 : index
      %43 = vector.load %arg6[%c0_28, %c0_29] : memref<8x1xf32, #tpu.memory_space<vmem>>, vector<8x1xf32>
      %44 = math.log %43 : vector<8x1xf32>
      %45 = arith.addf %42, %44 : vector<8x1xf32>
      %c0_30 = arith.constant 0 : index
      %c0_31 = arith.constant 0 : index
      %46 = vector.load %arg7[%c0_30, %c0_31] : memref<8x1xf32, #tpu.memory_space<vmem>>, vector<8x1xf32>
      %cst_32 = arith.constant 0.899999976 : f32
      %47 = vector.broadcast %cst_32 : f32 to vector<8x1xf32>
      %48 = arith.mulf %47, %46 : vector<8x1xf32>
      %49 = arith.subf %45, %48 : vector<8x1xf32>
      %c0_33 = arith.constant 0 : index
      %c0_34 = arith.constant 0 : index
      %50 = vector.load %arg8[%c0_33, %c0_34] : memref<8x1xf32, #tpu.memory_space<vmem>>, vector<8x1xf32>
      %cst_35 = arith.constant 3.125000e-03 : f32
      %51 = vector.broadcast %cst_35 : f32 to vector<8x1xf32>
      %52 = arith.mulf %51, %50 : vector<8x1xf32>
      %53 = arith.subf %49, %52 : vector<8x1xf32>
      %c0_36 = arith.constant 0 : index
      %c0_37 = arith.constant 0 : index
      %54 = vector.load %arg4[%c0_36, %c0_37] : memref<8x1xf32, #tpu.memory_space<vmem>>, vector<8x1xf32>
      tpu.vector_store %arg4[%c0_36, %c0_37], %53 {strides = array<i32>} : memref<8x1xf32, #tpu.memory_space<vmem>>, vector<8x1xf32>,
    } else {
    }
    return
  }
  func.func @transform_0(%arg0: i32, %arg1: i32) -> (i32, i32) {
    %c0_i32 = arith.constant 0 : i32
    return %arg0, %arg1 : i32, i32
  }
  func.func @transform_1(%arg0: i32, %arg1: i32) -> (i32, i32) {
    %c0_i32 = arith.constant 0 : i32
    %c0_i32_0 = arith.constant 0 : i32
    return %arg0, %c0_i32 : i32, i32
  }
  func.func @transform_2(%arg0: i32, %arg1: i32) -> (i32, i32) {
    %c0_i32 = arith.constant 0 : i32
    %c0_i32_0 = arith.constant 0 : i32
    return %arg0, %c0_i32 : i32, i32
  }
}

</mosaic_0001>

<llo_original>
// kernel: tpu_custom_call.1
$region0: #{tpu_custom_call.1}
  #allocation0 [shape = 'u32[]', space=smem, size = 0x4, offset = 0x4, fixed_abs, tag = 'smem constant byte address 0x4 - core index']
  #allocation1 [shape = 'u32[144,128]{1,0:T(1,128)}', space=vmem, size = 0x12000, scoped, tag = 'internal scratch']
  #allocation2 [shape = 'f32[8,1]{1,0:T(8,128)}', space=vmem, size = 0x1000, scoped, tag = 'scratch operand']
  #allocation3 [shape = 'f32[8,1]{1,0:T(8,128)}', space=vmem, size = 0x1000, scoped, tag = 'scratch operand']
  #allocation4 [shape = 'f32[8,1]{1,0:T(8,128)}', space=vmem, size = 0x1000, scoped, tag = 'scratch operand']
  #allocation5 [shape = 'f32[8,1]{1,0:T(8,128)}', space=vmem, size = 0x1000, scoped, tag = 'scratch operand']
  %s0 = inlined_call_operand.vmem [shape: f32[8,32], index: 0, kind: input, shape index: {}]
  %s1 = inlined_call_operand.vmem [shape: s32[8,1], index: 1, kind: input, shape index: {}]
  %s2 = inlined_call_operand.vmem [shape: f32[8,1], index: 2, kind: output, shape index: {}]
  %s3 = sld [smem:[#allocation0]]
  $region26: #{tpu_custom_call.1} parent=0
    _
  %s5 = ssub.s32 1, %s3
  %s6 = scalar_select 0, %s5, %s3
  // Predicated region
  $region2: #{tpu_custom_call.1} parent=0 // pred_check
    _
  $region3: #{tpu_custom_call.1} parent=0 // pred_check_branch
    %8 = sbr.rel (0) target = $region5
  $region4: #{tpu_custom_call.1} parent=0 // pred_region
    _
  $region5: #{tpu_custom_call.1} parent=0 // pred_fallthru
    _
  // Predicated region
  $region6: #{tpu_custom_call.1} parent=0 // pred_check
    _
  $region7: #{tpu_custom_call.1} parent=0 // pred_check_branch
    %10 = sbr.rel (0) target = $region9
  $region8: #{tpu_custom_call.1} parent=0 // pred_region
    _
  $region9: #{tpu_custom_call.1} parent=0 // pred_fallthru
    _
  %p11 = scmp.eq.s32.totalorder 0, 0
  // Predicated region
  $region10: #{tpu_custom_call.1} parent=0 // pred_check
    %p12 = pneg %p11
  $region11: #{tpu_custom_call.1} parent=0 // pred_check_branch
    %14 = sbr.rel (%p12) target = $region13
  $region12: #{tpu_custom_call.1} parent=0 // pred_region
    %vm15 = vcmask 7168
    %16 = vst.msk [vmem:[#allocation2] sm:$0xff] %vm15, -3.4028235e+38
    %17 = vst.msk [vmem:[#allocation3] sm:$0xff] %vm15, 0.0
    %18 = vst.msk [vmem:[#allocation4] sm:$0xff] %vm15, 0.0
    %19 = vst.msk [vmem:[#allocation5] sm:$0xff] %vm15, 0.0
  $region13: #{tpu_custom_call.1} parent=0 // pred_fallthru
    _
  %v20 = vld [vmem:[%s0] sm:$0xff]
  %v21 = vld [vmem:[%s1] sm:$0xff]
  %v22 = vlaneseq
  %v23 = vand.u32 %v22, 127
  %s24 = smul.u32 0, 32
  %v25 = vstv %s24
  %v26 = vadd.s32 %v23, %v25
  %27 = vset.pattern.permute.xlu0 0
  %28 = vperm.xlu0 %27, %v21
  %v29 = vpop.permute.xlu0 %28
  %vm30 = vcmp.eq.s32.totalorder %v26, %v29
  %v31 = vld [vmem:[#allocation2] sm:$0xff]
  %vm32 = vcmask 261120
  %v33 = vsel %vm32, %v20, -inf
  %34 = vmax.xlane.f32.xlu0 %v33
  %v35 = vpop.xlane.xlu0 %34
  %v36 = vmax.f32 %v31, %v35
  %v37 = vsub.f32 %v31, %v36
  %v38 = vmul.f32 %v37, 1.442695
  %v39 = vpow.pop %v38
  %41 = vset.pattern.permute.xlu0 0
  %42 = vperm.xlu0 %41, %v36
  %v43 = vpop.permute.xlu0 %42
  %v45 = vsub.f32 %v20, %v43
  %v46 = vmul.f32 %v45, 1.442695
  %v47 = vpow.pop %v46
  %v48 = vld [vmem:[#allocation3] sm:$0xff]
  %v49 = vmul.f32 %v39, %v48
  %v50 = vsel %vm32, %v47, 0.0
  %51 = vadd.xlane.f32.xlu0 %v50
  %v52 = vpop.xlane.xlu0 %51
  %v53 = vadd.f32 %v49, %v52
  %vm54 = vcmask 7168
  %55 = vst.msk [vmem:[#allocation3] sm:$0xff] %vm54, %v53
  %56 = vst.msk [vmem:[#allocation2] sm:$0xff] %vm54, %v36
  %v57 = vld [vmem:[#allocation4] sm:$0xff]
  %v58 = vsel %vm30, %v20, 0.0
  %v59 = vsel %vm32, %v58, 0.0
  %60 = vadd.xlane.f32.xlu0 %v59
  %v61 = vpop.xlane.xlu0 %60
  %v62 = vadd.f32 %v57, %v61
  %63 = vst.msk [vmem:[#allocation4] sm:$0xff] %vm54, %v62
  %v64 = vld [vmem:[#allocation5] sm:$0xff]
  %v65 = vsel %vm32, %v20, 0.0
  %66 = vadd.xlane.f32.xlu0 %v65
  %v67 = vpop.xlane.xlu0 %66
  %v68 = vadd.f32 %v64, %v67
  %69 = vst.msk [vmem:[#allocation5] sm:$0xff] %vm54, %v68
  // Predicated region
  $region14: #{tpu_custom_call.1} parent=0 // pred_check
    %p70 = pneg %p11
  $region15: #{tpu_custom_call.1} parent=0 // pred_check_branch
    %72 = sbr.rel (%p70) target = $region17
  $region16: #{tpu_custom_call.1} parent=0 // pred_region
    %v73 = vld [vmem:[#allocation2] sm:$0xff]
    %v74 = vld [vmem:[#allocation3] sm:$0xff]
    %v75 = vlog2.pop %v74
    %v76 = vmul.f32 %v75, 0.6931472
    %v77 = vadd.f32 %v73, %v76
    %v78 = vld [vmem:[#allocation4] sm:$0xff]
    %v79 = vmul.f32 %v78, 0.9
    %v80 = vsub.f32 %v77, %v79
    %v81 = vld [vmem:[#allocation5] sm:$0xff]
    %v82 = vmul.f32 %v81, 0.003125
    %v83 = vsub.f32 %v80, %v82
    %84 = vst.msk [vmem:[%s2] sm:$0xff] %vm54, %v83
  $region17: #{tpu_custom_call.1} parent=0 // pred_fallthru
    _
  // Predicated region
  $region18: #{tpu_custom_call.1} parent=0 // pred_check
    _
  $region19: #{tpu_custom_call.1} parent=0 // pred_check_branch
    %86 = sbr.rel (0) target = $region21
  $region20: #{tpu_custom_call.1} parent=0 // pred_region
    _
  $region21: #{tpu_custom_call.1} parent=0 // pred_fallthru
    _
  // Predicated region
  $region22: #{tpu_custom_call.1} parent=0 // pred_check
    _
  $region23: #{tpu_custom_call.1} parent=0 // pred_check_branch
    %88 = sbr.rel (0) target = $region25
  $region24: #{tpu_custom_call.1} parent=0 // pred_region
    _
  $region25: #{tpu_custom_call.1} parent=0 // pred_fallthru
    _

</llo_original>
